<compile_context>
chip_gen: v7x
topology: tpu7x:2x2x1
jax: 0.10.0
libtpu: 0.0.40
codegen_flags: <defaults>
</compile_context>

<pallas_src>
import jax
import jax.numpy as jnp
from jax.experimental import pallas as pl
from jax.experimental.pallas import tpu as pltpu


def _round_up(x, m):
    return (x + m - 1) // m * m


def _default_batch_tile():
    # v5e MXU is 4x 128x128 -> 128-row LHS tiles already saturate it; v6e/v7x are 256-wide.
    try:
        kind = jax.devices()[0].device_kind.lower()
    except Exception:
        kind = ""
    if "v5 lite" in kind or "v5e" in kind or "v5litepod" in kind:
        return 128
    return 256


def _vmem_limit_bytes(tb, in_p, h1_p, h2_p, out_p):
    bf16, f32 = 2, 4
    weights = in_p * h1_p * bf16 + h1_p * h2_p * bf16 + h2_p * bf16
    biases = (h1_p + h2_p + 1) * f32
    io = tb * in_p * bf16 + tb * out_p * f32
    acts = tb * h1_p * f32 + tb * h2_p * f32 + tb * h2_p * bf16
    # Double-buffering headroom on all pipelined buffers + compiler scratch margin,
    # capped at 48 MiB so there is always headroom on v7x's 64 MiB VMEM per TensorCore.
    est = 2 * (weights + biases + io) + acts + (4 << 20)
    return int(max(16 << 20, min(48 << 20, est)))


def mlp_kernel(x_ref, w1_ref, b1_ref, w2_ref, b2_ref, w3_ref, b3_ref, o_ref):
    # Layer 1: Linear (bf16 x bf16 -> f32 accumulate on the MXU), bias + ReLU in f32.
    h = jnp.dot(x_ref[...], w1_ref[...], preferred_element_type=jnp.float32)
    h = jnp.maximum(h + b1_ref[...], 0.0)
    # Layer 2: Linear + ReLU (dropout = identity at inference).
    h = jnp.dot(h.astype(jnp.bfloat16), w2_ref[...], preferred_element_type=jnp.float32)
    h = jnp.maximum(h + b2_ref[...], 0.0)
    # Output layer (hidden -> 1): matrix-vector product as a lane reduction (XLU slot),
    # result broadcast across 128 lanes so the store stays lane-dense / unmasked.
    w3 = w3_ref[...].astype(jnp.float32)                              # (1, h2_p)
    out = jnp.sum(h * w3, axis=-1, keepdims=True) + b3_ref[...]       # (TB, 1)
    o_ref[...] = jnp.broadcast_to(out, o_ref.shape)


def prepare_params(params):
    """Pad weights to TPU tile sizes and cast to bf16 -- done ONCE, outside the forward path."""
    w1, b1 = params["w1"], params["b1"]
    w2, b2 = params["w2"], params["b2"]
    w3, b3 = params["w3"], params["b3"]
    in_f, h1 = w1.shape
    h2 = w2.shape[1]
    assert w3.shape[1] == 1, "reduction-based output layer assumes output_size == 1"

    in_p = _round_up(in_f, 128)
    h1_p = _round_up(h1, 128)
    h2_p = _round_up(h2, 128)

    w1_p = jnp.zeros((in_p, h1_p), jnp.bfloat16).at[:in_f, :h1].set(w1.astype(jnp.bfloat16))
    b1_p = jnp.zeros((1, h1_p), jnp.float32).at[0, :h1].set(b1.astype(jnp.float32))
    w2_p = jnp.zeros((h1_p, h2_p), jnp.bfloat16).at[:h1, :h2].set(w2.astype(jnp.bfloat16))
    b2_p = jnp.zeros((1, h2_p), jnp.float32).at[0, :h2].set(b2.astype(jnp.float32))
    # Final layer stored as a (1, h2_p) row so the kernel can do h * w3 -> lane reduction.
    w3_p = jnp.zeros((1, h2_p), jnp.bfloat16).at[0, :h2].set(w3[:, 0].astype(jnp.bfloat16))
    b3_p = jnp.asarray(b3, jnp.float32).reshape(1, 1)

    meta = dict(in_f=in_f, in_p=in_p, h1_p=h1_p, h2_p=h2_p)
    return (w1_p, b1_p, w2_p, b2_p, w3_p, b3_p), meta


def distance_predictor_forward(x, prepared):
    """Runs the fused 3-layer MLP (x: (B, input_size) f32) -> (B, 1) f32."""
    (w1_p, b1_p, w2_p, b2_p, w3_p, b3_p), meta = prepared
    in_f, in_p = meta["in_f"], meta["in_p"]
    h1_p, h2_p = meta["h1_p"], meta["h2_p"]
    out_p = 128  # lane-dense padded output width

    B = x.shape[0]
    tb = min(_default_batch_tile(), _round_up(B, 8))
    bp = _round_up(B, tb)

    # Only the (small) activation is padded per call; weights were padded/cast once.
    x_p = jnp.zeros((bp, in_p), jnp.bfloat16).at[:B, :in_f].set(x.astype(jnp.bfloat16))

    const = lambda i: (0, 0)
    out = pl.pallas_call(
        mlp_kernel,
        out_shape=jax.ShapeDtypeStruct((bp, out_p), jnp.float32),
        grid=(bp // tb,),
        in_specs=[
            pl.BlockSpec((tb, in_p), lambda i: (i, 0)),    # x: tiled over batch
            pl.BlockSpec((in_p, h1_p), const),             # w1: VMEM-resident
            pl.BlockSpec((1, h1_p), const),                # b1
            pl.BlockSpec((h1_p, h2_p), const),             # w2
            pl.BlockSpec((1, h2_p), const),                # b2
            pl.BlockSpec((1, h2_p), const),                # w3 (row vector)
            pl.BlockSpec((1, 1), const),                   # b3 (scalar)
        ],
        out_specs=pl.BlockSpec((tb, out_p), lambda i: (i, 0)),
        compiler_params=pltpu.CompilerParams(
            dimension_semantics=("parallel",),
            vmem_limit_bytes=_vmem_limit_bytes(tb, in_p, h1_p, h2_p, out_p),
        ),
    )(x_p, w1_p, b1_p, w2_p, b2_p, w3_p, b3_p)

    return out[:B, :1]


def init_params(key, input_size, hidden_layers, output_size):
    """Deterministic PyTorch-style init: U(-1/sqrt(fan_in), 1/sqrt(fan_in))."""
    dims = [input_size] + list(hidden_layers) + [output_size]
    params = {}
    names = ["1", "2", "3"]
    for i, (fi, fo) in enumerate(zip(dims[:-1], dims[1:])):
        key, kw, kb = jax.random.split(key, 3)
        bound = 1.0 / jnp.sqrt(jnp.float32(fi))
        params[f"w{names[i]}"] = jax.random.uniform(
            kw, (fi, fo), jnp.float32, minval=-bound, maxval=bound
        )
        params[f"b{names[i]}"] = jax.random.uniform(
            kb, (fo,), jnp.float32, minval=-bound, maxval=bound
        )
    return params


def reference_forward(x, params):
    h = jnp.maximum(x @ params["w1"] + params["b1"], 0.0)
    h = jnp.maximum(h @ params["w2"] + params["b2"], 0.0)
    return h @ params["w3"] + params["b3"]


if __name__ == "__main__":
    # Small shapes consistent with the module: input_size=14, two hidden layers, output_size=1.
    batch = 8
    input_size = 14
    hidden_layers = [256, 256]   # scaled-down stand-in for [1400, 1400]
    output_size = 1

    key = jax.random.PRNGKey(0)
    key, kx = jax.random.split(key)
    params = init_params(key, input_size, hidden_layers, output_size)
    x = jax.random.normal(kx, (batch, input_size), jnp.float32)

    prepared = prepare_params(params)          # one-time padding + bf16 cast
    out = distance_predictor_forward(x, prepared)
    out = jax.block_until_ready(out)

    ref = reference_forward(x, params)         # f32 reference
    assert out.shape == (batch, output_size), out.shape
    max_err = jnp.max(jnp.abs(out - ref))
    # bf16 weights/activations with f32 accumulation => loosened tolerance vs f32 reference.
    assert jnp.allclose(out, ref, atol=5e-2, rtol=5e-2), f"max abs err {max_err}"
    print("KERNEL_OK")
</pallas_src>

<mosaic_0001>
module attributes {stable_mosaic.version = 11 : i64} {
  func.func @mlp_kernel(%arg0: i32, %arg1: memref<8x128xbf16, #tpu.memory_space<vmem>>, %arg2: memref<128x256xbf16, #tpu.memory_space<vmem>>, %arg3: memref<1x256xf32, #tpu.memory_space<vmem>>, %arg4: memref<256x256xbf16, #tpu.memory_space<vmem>>, %arg5: memref<1x256xf32, #tpu.memory_space<vmem>>, %arg6: memref<1x256xbf16, #tpu.memory_space<vmem>>, %arg7: memref<1x1xf32, #tpu.memory_space<vmem>>, %arg8: memref<8x128xf32, #tpu.memory_space<vmem>>) attributes {dimension_semantics = [#tpu.dimension_semantics<parallel>], iteration_bounds = array<i64: 1>, scalar_prefetch = 0 : i64, scratch_operands = 0 : i64, tpu.core_type = #tpu.core_type<tc>, window_params = [{transform_indices = @transform_0, window_bounds = array<i64: 8, 128>}, {pipeline_mode = #tpu.pipeline_mode<synchronous>, transform_indices = @transform_1, window_bounds = array<i64: 128, 256>}, {pipeline_mode = #tpu.pipeline_mode<synchronous>, transform_indices = @transform_2, window_bounds = array<i64: 1, 256>}, {pipeline_mode = #tpu.pipeline_mode<synchronous>, transform_indices = @transform_3, window_bounds = array<i64: 256, 256>}, {pipeline_mode = #tpu.pipeline_mode<synchronous>, transform_indices = @transform_4, window_bounds = array<i64: 1, 256>}, {pipeline_mode = #tpu.pipeline_mode<synchronous>, transform_indices = @transform_5, window_bounds = array<i64: 1, 256>}, {pipeline_mode = #tpu.pipeline_mode<synchronous>, transform_indices = @transform_6, window_bounds = array<i64: 1, 1>}, {transform_indices = @transform_7, window_bounds = array<i64: 8, 128>}]} {
    %c0 = arith.constant 0 : index
    %c0_0 = arith.constant 0 : index
    %0 = vector.load %arg1[%c0, %c0_0] : memref<8x128xbf16, #tpu.memory_space<vmem>>, vector<8x128xbf16>
    %c0_1 = arith.constant 0 : index
    %c0_2 = arith.constant 0 : index
    %1 = vector.load %arg2[%c0_1, %c0_2] : memref<128x256xbf16, #tpu.memory_space<vmem>>, vector<128x256xbf16>
    %cst = arith.constant dense<0.000000e+00> : vector<8x256xf32>
    %2 = tpu.matmul %0, %1, %cst {dimension_numbers = #tpu.dot_dimension_numbers<[1], [0], [0], [1], [0, 0, 1, 1], [], []>} : vector<8x128xbf16>, vector<128x256xbf16>, vector<8x256xf32> -> vector<8x256xf32>
    %c0_3 = arith.constant 0 : index
    %c0_4 = arith.constant 0 : index
    %3 = vector.load %arg3[%c0_3, %c0_4] : memref<1x256xf32, #tpu.memory_space<vmem>>, vector<1x256xf32>
    %4 = vector.broadcast %3 : vector<1x256xf32> to vector<8x256xf32>
    %5 = arith.addf %2, %4 : vector<8x256xf32>
    %cst_5 = arith.constant 0.000000e+00 : f32
    %6 = vector.broadcast %cst_5 : f32 to vector<8x256xf32>
    %7 = arith.maximumf %5, %6 : vector<8x256xf32>
    %8 = arith.truncf %7 : vector<8x256xf32> to vector<8x256xbf16>
    %c0_6 = arith.constant 0 : index
    %c0_7 = arith.constant 0 : index
    %9 = vector.load %arg4[%c0_6, %c0_7] : memref<256x256xbf16, #tpu.memory_space<vmem>>, vector<256x256xbf16>
    %cst_8 = arith.constant dense<0.000000e+00> : vector<8x256xf32>
    %10 = tpu.matmul %8, %9, %cst_8 {dimension_numbers = #tpu.dot_dimension_numbers<[1], [0], [0], [1], [0, 0, 1, 1], [], []>} : vector<8x256xbf16>, vector<256x256xbf16>, vector<8x256xf32> -> vector<8x256xf32>
    %c0_9 = arith.constant 0 : index
    %c0_10 = arith.constant 0 : index
    %11 = vector.load %arg5[%c0_9, %c0_10] : memref<1x256xf32, #tpu.memory_space<vmem>>, vector<1x256xf32>
    %12 = vector.broadcast %11 : vector<1x256xf32> to vector<8x256xf32>
    %13 = arith.addf %10, %12 : vector<8x256xf32>
    %cst_11 = arith.constant 0.000000e+00 : f32
    %14 = vector.broadcast %cst_11 : f32 to vector<8x256xf32>
    %15 = arith.maximumf %13, %14 : vector<8x256xf32>
    %c0_12 = arith.constant 0 : index
    %c0_13 = arith.constant 0 : index
    %16 = vector.load %arg6[%c0_12, %c0_13] : memref<1x256xbf16, #tpu.memory_space<vmem>>, vector<1x256xbf16>
    %17 = arith.extf %16 : vector<1x256xbf16> to vector<1x256xf32>
    %18 = vector.broadcast %17 : vector<1x256xf32> to vector<8x256xf32>
    %19 = arith.mulf %15, %18 : vector<8x256xf32>
    %cst_14 = arith.constant dense<0.000000e+00> : vector<8xf32>
    %20 = vector.multi_reduction <add>, %19, %cst_14 [1] : vector<8x256xf32> to vector<8xf32>
    %21 = vector.shape_cast %20 : vector<8xf32> to vector<8x1xf32>
    %c0_15 = arith.constant 0 : index
    %c0_16 = arith.constant 0 : index
    %22 = vector.load %arg7[%c0_15, %c0_16] : memref<1x1xf32, #tpu.memory_space<vmem>>, vector<1x1xf32>
    %23 = vector.broadcast %22 : vector<1x1xf32> to vector<8x1xf32>
    %24 = arith.addf %21, %23 : vector<8x1xf32>
    %25 = vector.shape_cast %24 : vector<8x1xf32> to vector<8x1xf32>
    %26 = vector.broadcast %25 : vector<8x1xf32> to vector<8x128xf32>
    %c0_17 = arith.constant 0 : index
    %c0_18 = arith.constant 0 : index
    %27 = vector.load %arg8[%c0_17, %c0_18] : memref<8x128xf32, #tpu.memory_space<vmem>>, vector<8x128xf32>
    tpu.vector_store %arg8[%c0_17, %c0_18], %26 {strides = array<i32>} : memref<8x128xf32, #tpu.memory_space<vmem>>, vector<8x128xf32>,
    return
  }
  func.func @transform_0(%arg0: i32) -> (i32, i32) {
    %c0_i32 = arith.constant 0 : i32
    %c0_i32_0 = arith.constant 0 : i32
    return %arg0, %c0_i32 : i32, i32
  }
  func.func @transform_1(%arg0: i32) -> (i32, i32) {
    %c0_i32 = arith.constant 0 : i32
    %c0_i32_0 = arith.constant 0 : i32
    %c0_i32_1 = arith.constant 0 : i32
    return %c0_i32, %c0_i32_0 : i32, i32
  }
  func.func @transform_2(%arg0: i32) -> (i32, i32) {
    %c0_i32 = arith.constant 0 : i32
    %c0_i32_0 = arith.constant 0 : i32
    %c0_i32_1 = arith.constant 0 : i32
    return %c0_i32, %c0_i32_0 : i32, i32
  }
  func.func @transform_3(%arg0: i32) -> (i32, i32) {
    %c0_i32 = arith.constant 0 : i32
    %c0_i32_0 = arith.constant 0 : i32
    %c0_i32_1 = arith.constant 0 : i32
    return %c0_i32, %c0_i32_0 : i32, i32
  }
  func.func @transform_4(%arg0: i32) -> (i32, i32) {
    %c0_i32 = arith.constant 0 : i32
    %c0_i32_0 = arith.constant 0 : i32
    %c0_i32_1 = arith.constant 0 : i32
    return %c0_i32, %c0_i32_0 : i32, i32
  }
  func.func @transform_5(%arg0: i32) -> (i32, i32) {
    %c0_i32 = arith.constant 0 : i32
    %c0_i32_0 = arith.constant 0 : i32
    %c0_i32_1 = arith.constant 0 : i32
    return %c0_i32, %c0_i32_0 : i32, i32
  }
  func.func @transform_6(%arg0: i32) -> (i32, i32) {
    %c0_i32 = arith.constant 0 : i32
    %c0_i32_0 = arith.constant 0 : i32
    %c0_i32_1 = arith.constant 0 : i32
    return %c0_i32, %c0_i32_0 : i32, i32
  }
  func.func @transform_7(%arg0: i32) -> (i32, i32) {
    %c0_i32 = arith.constant 0 : i32
    %c0_i32_0 = arith.constant 0 : i32
    return %arg0, %c0_i32 : i32, i32
  }
}

</mosaic_0001>

<llo_original>
// kernel: tpu_custom_call.1
$region0: #{tpu_custom_call.1}
  #allocation0 [shape = 'u32[]', space=smem, size = 0x4, offset = 0x4, fixed_abs, tag = 'smem constant byte address 0x4 - core index']
  #allocation1 [shape = 'u32[144,128]{1,0:T(1,128)}', space=vmem, size = 0x12000, scoped, tag = 'internal scratch']
  #allocation2 [shape = 'f32[1,1]{1,0:T(1,128)S(1)}', space=vmem, size = 0x200, scoped, tag = 'scoped memory for tpu_custom_call.1']
  %s0 = inlined_call_operand.hbm [shape: bf16[8,128], index: 0, kind: input, shape index: {}]
  %s1 = inlined_call_operand.hbm [shape: bf16[128,256], index: 1, kind: input, shape index: {}]
  %s2 = inlined_call_operand.vmem [shape: f32[1,256], index: 2, kind: input, shape index: {}]
  %s3 = inlined_call_operand.hbm [shape: bf16[256,256], index: 3, kind: input, shape index: {}]
  %s4 = inlined_call_operand.vmem [shape: f32[1,256], index: 4, kind: input, shape index: {}]
  %s5 = inlined_call_operand.vmem [shape: bf16[1,256], index: 5, kind: input, shape index: {}]
  %s6 = inlined_call_operand.<no memory space> [shape: f32[1,1], index: 6, kind: input, shape index: {}]
  %s7 = inlined_call_operand.hbm [shape: f32[8,128], index: 7, kind: output, shape index: {}]
  %s8 = sld [smem:[#allocation0]]
  $region50: #{tpu_custom_call.1} parent=0
    _
  %s10 = ssub.s32 1, %s8
  %s11 = scalar_select 0, %s10, %s8
  %v12 = vstv %s6
  %13 = vst [vmem:[#allocation2] sm:$0x1] %v12
  $region1: #{tpu_custom_call.1} parent=0
    #allocation3 [shape = 'u8[2048]{0}', space=vmem, size = 0x800, scoped, tag = 'input window, operand 0, single buffered']
    #allocation4 [shape = 's32[1]{0}', space=sflag, size = 0x4, scoped, tag = 'scoped memory for tpu_custom_call.1']
    #allocation5 [shape = 's32[1]{0}', space=sflag, size = 0x4, scoped, tag = 'scoped memory for tpu_custom_call.1']
    #allocation6 [shape = 'u8[65536]{0}', space=vmem, size = 0x10000, scoped, tag = 'input window, operand 1, single buffered']
    #allocation7 [shape = 's32[1]{0}', space=sflag, size = 0x4, scoped, tag = 'scoped memory for tpu_custom_call.1']
    #allocation8 [shape = 'u8[131072]{0}', space=vmem, size = 0x20000, scoped, tag = 'input window, operand 3, single buffered']
    #allocation9 [shape = 'u8[4096]{0}', space=vmem, size = 0x1000, scoped, tag = 'output window, operand 0, single buffered']
    %14 = vsyncpa [#allocation4], 0
    %15 = vsyncpa [#allocation7], 0
    %16 = vsyncpa [#allocation5], 0
    // Predicated region
    $region2: #{tpu_custom_call.1} parent=1 // pred_check
      _
    $region3: #{tpu_custom_call.1} parent=1 // pred_check_branch
      %18 = sbr.rel (0) target = $region5
    $region4: #{tpu_custom_call.1} parent=1 // pred_region
      %s20 = ssub.s32 64, 64
      %21 = vsyncadd [#allocation4], %s20
      %s23 = sshll.u32 [#allocation3], 4
      %s24 = int_to_ptr.vmem [resolvable:$true] %s23
      %26 = dma.hbm_to_vmem [thread:$0]  %s0, 64, %s24, [#allocation4]
    $region5: #{tpu_custom_call.1} parent=1 // pred_fallthru
      _
    // Predicated region
    $region6: #{tpu_custom_call.1} parent=1 // pred_check
      _
    $region7: #{tpu_custom_call.1} parent=1 // pred_check_branch
      %28 = sbr.rel (0) target = $region9
    $region8: #{tpu_custom_call.1} parent=1 // pred_region
      %s30 = ssub.s32 2048, 2048
      %31 = vsyncadd [#allocation7], %s30
      %s32 = sshll.u32 [#allocation6], 4
      %s33 = int_to_ptr.vmem [resolvable:$true] %s32
      %38 = dma.hbm_to_vmem [thread:$0]  %s1, 2048, %s33, [#allocation7], 128, 128, 8
    $region9: #{tpu_custom_call.1} parent=1 // pred_fallthru
      _
    // Predicated region
    $region10: #{tpu_custom_call.1} parent=1 // pred_check
      _
    $region11: #{tpu_custom_call.1} parent=1 // pred_check_branch
      %40 = sbr.rel (0) target = $region13
    $region12: #{tpu_custom_call.1} parent=1 // pred_region
      _
    $region13: #{tpu_custom_call.1} parent=1 // pred_fallthru
      _
    // Predicated region
    $region14: #{tpu_custom_call.1} parent=1 // pred_check
      _
    $region15: #{tpu_custom_call.1} parent=1 // pred_check_branch
      %42 = sbr.rel (0) target = $region17
    $region16: #{tpu_custom_call.1} parent=1 // pred_region
      %s44 = ssub.s32 4096, 4096
      %45 = vsyncadd [#allocation7], %s44
      %s46 = sshll.u32 [#allocation8], 4
      %s47 = int_to_ptr.vmem [resolvable:$true] %s46
      %52 = dma.hbm_to_vmem [thread:$0]  %s3, 4096, %s47, [#allocation7], 128, 128, 8
    $region17: #{tpu_custom_call.1} parent=1 // pred_fallthru
      _
    // Predicated region
    $region18: #{tpu_custom_call.1} parent=1 // pred_check
      _
    $region19: #{tpu_custom_call.1} parent=1 // pred_check_branch
      %54 = sbr.rel (0) target = $region21
    $region20: #{tpu_custom_call.1} parent=1 // pred_region
      _
    $region21: #{tpu_custom_call.1} parent=1 // pred_fallthru
      _
    // Predicated region
    $region22: #{tpu_custom_call.1} parent=1 // pred_check
      _
    $region23: #{tpu_custom_call.1} parent=1 // pred_check_branch
      %56 = sbr.rel (0) target = $region25
    $region24: #{tpu_custom_call.1} parent=1 // pred_region
      _
    $region25: #{tpu_custom_call.1} parent=1 // pred_fallthru
      _
    // Predicated region
    $region26: #{tpu_custom_call.1} parent=1 // pred_check
      _
    $region27: #{tpu_custom_call.1} parent=1 // pred_check_branch
      %58 = sbr.rel (0) target = $region29
    $region28: #{tpu_custom_call.1} parent=1 // pred_region
      _
    $region29: #{tpu_custom_call.1} parent=1 // pred_fallthru
      _
    // Predicated region
    $region30: #{tpu_custom_call.1} parent=1 // pred_check
      _
    $region31: #{tpu_custom_call.1} parent=1 // pred_check_branch
      %60 = sbr.rel (0) target = $region33
    $region32: #{tpu_custom_call.1} parent=1 // pred_region
      %61 = dma.done [#allocation4], 64
    $region33: #{tpu_custom_call.1} parent=1 // pred_fallthru
      _
    // Predicated region
    $region34: #{tpu_custom_call.1} parent=1 // pred_check
      _
    $region35: #{tpu_custom_call.1} parent=1 // pred_check_branch
      %63 = sbr.rel (0) target = $region37
    $region36: #{tpu_custom_call.1} parent=1 // pred_region
      %64 = dma.done [#allocation7], 2048
    $region37: #{tpu_custom_call.1} parent=1 // pred_fallthru
      _
    // Predicated region
    $region38: #{tpu_custom_call.1} parent=1 // pred_check
      _
    $region39: #{tpu_custom_call.1} parent=1 // pred_check_branch
      %66 = sbr.rel (0) target = $region41
    $region40: #{tpu_custom_call.1} parent=1 // pred_region
      %67 = dma.done [#allocation7], 4096
    $region41: #{tpu_custom_call.1} parent=1 // pred_fallthru
      _
    %v69 = vld [vmem:[#allocation3] sm:$0xf]
    %v70 = vld [vmem:[#allocation6] sm:$0xff]
    %v71 = vld [vmem:[#allocation6 + $0x8] sm:$0xff]
    %v72 = vld [vmem:[#allocation6 + $0x10] sm:$0xff]
    %v73 = vld [vmem:[#allocation6 + $0x18] sm:$0xff]
    %v74 = vld [vmem:[#allocation6 + $0x20] sm:$0xff]
    %v75 = vld [vmem:[#allocation6 + $0x28] sm:$0xff]
    %v76 = vld [vmem:[#allocation6 + $0x30] sm:$0xff]
    %v77 = vld [vmem:[#allocation6 + $0x38] sm:$0xff]
    %v78 = vld [vmem:[#allocation6 + $0x40] sm:$0xff]
    %v79 = vld [vmem:[#allocation6 + $0x48] sm:$0xff]
    %v80 = vld [vmem:[#allocation6 + $0x50] sm:$0xff]
    %v81 = vld [vmem:[#allocation6 + $0x58] sm:$0xff]
    %v82 = vld [vmem:[#allocation6 + $0x60] sm:$0xff]
    %v83 = vld [vmem:[#allocation6 + $0x68] sm:$0xff]
    %v84 = vld [vmem:[#allocation6 + $0x70] sm:$0xff]
    %v85 = vld [vmem:[#allocation6 + $0x78] sm:$0xff]
    %v86 = vld [vmem:[%s2] sm:$0x3]
    %v88 = vlaneseq
    %v89 = vshrl.u32 %v88, 7
    %v90 = vsub.s32 0, %v89
    %v91 = vrot.slane %v86, %v90
    %v92 = vlaneseq
    %v93 = vshrl.u32 %v92, 7
    %v94 = vsub.s32 1, %v93
    %v95 = vrot.slane %v86, %v94
    %v114 = vunpack.c.l.b16 %v70
    %v115 = vunpack.c.h.b16 %v70
    %v116 = vunpack.c.l.b16 %v71
    %v117 = vunpack.c.h.b16 %v71
    %v118 = vunpack.c.l.b16 %v72
    %v119 = vunpack.c.h.b16 %v72
    %v120 = vunpack.c.l.b16 %v73
    %v121 = vunpack.c.h.b16 %v73
    %v122 = vunpack.c.l.b16 %v74
    %v123 = vunpack.c.h.b16 %v74
    %v124 = vunpack.c.l.b16 %v75
    %v125 = vunpack.c.h.b16 %v75
    %v126 = vunpack.c.l.b16 %v76
    %v127 = vunpack.c.h.b16 %v76
    %v128 = vunpack.c.l.b16 %v77
    %v129 = vunpack.c.h.b16 %v77
    %v130 = vunpack.c.l.b16 %v78
    %v131 = vunpack.c.h.b16 %v78
    %v132 = vunpack.c.l.b16 %v79
    %v133 = vunpack.c.h.b16 %v79
    %v134 = vunpack.c.l.b16 %v80
    %v135 = vunpack.c.h.b16 %v80
    %v136 = vunpack.c.l.b16 %v81
    %v137 = vunpack.c.h.b16 %v81
    %v138 = vunpack.c.l.b16 %v82
    %v139 = vunpack.c.h.b16 %v82
    %v140 = vunpack.c.l.b16 %v83
    %v141 = vunpack.c.h.b16 %v83
    %v142 = vunpack.c.l.b16 %v84
    %v143 = vunpack.c.h.b16 %v84
    %v144 = vunpack.c.l.b16 %v85
    %v145 = vunpack.c.h.b16 %v85
    %v146 = vpack.c.b16 %v116, %v114
    %v147 = vpack.c.b16 %v117, %v115
    %v148 = vpack.c.b16 %v120, %v118
    %v149 = vpack.c.b16 %v121, %v119
    %v150 = vpack.c.b16 %v124, %v122
    %v151 = vpack.c.b16 %v125, %v123
    %v152 = vpack.c.b16 %v128, %v126
    %v153 = vpack.c.b16 %v129, %v127
    %v154 = vpack.c.b16 %v132, %v130
    %v155 = vpack.c.b16 %v133, %v131
    %v156 = vpack.c.b16 %v136, %v134
    %v157 = vpack.c.b16 %v137, %v135
    %v158 = vpack.c.b16 %v140, %v138
    %v159 = vpack.c.b16 %v141, %v139
    %v160 = vpack.c.b16 %v144, %v142
    %v161 = vpack.c.b16 %v145, %v143
    %178 = vmatprep.subr.bf16.mxu0 %v147
    %179 = vmatpush1.bf16.msra.mxu0 %v146
    %180 = vmatprep.subr.bf16.mxu0 %v149
    %181 = vmatpush1.bf16.msra.mxu0 %v148
    %182 = vmatprep.subr.bf16.mxu0 %v151
    %183 = vmatpush1.bf16.msra.mxu0 %v150
    %184 = vmatprep.subr.bf16.mxu0 %v153
    %185 = vmatpush1.bf16.msra.mxu0 %v152
    %186 = vmatprep.subr.bf16.mxu0 %v155
    %187 = vmatpush1.bf16.msra.mxu0 %v154
    %188 = vmatprep.subr.bf16.mxu0 %v157
    %189 = vmatpush1.bf16.msra.mxu0 %v156
    %190 = vmatprep.subr.bf16.mxu0 %v159
    %191 = vmatpush1.bf16.msra.mxu0 %v158
    %192 = vmatprep.subr.bf16.mxu0 %v161
    %193 = vmatpush1.bf16.msra.mxu0 %v160
    %194 = vmatprep.subr.bf16.mxu0 0
    %195 = vmatpush1.bf16.msra.mxu0 0
    %196 = vmatprep.subr.bf16.mxu0 0
    %197 = vmatpush1.bf16.msra.mxu0 0
    %198 = vmatprep.subr.bf16.mxu0 0
    %199 = vmatpush1.bf16.msra.mxu0 0
    %200 = vmatprep.subr.bf16.mxu0 0
    %201 = vmatpush1.bf16.msra.mxu0 0
    %202 = vmatprep.subr.bf16.mxu0 0
    %203 = vmatpush1.bf16.msra.mxu0 0
    %204 = vmatprep.subr.bf16.mxu0 0
    %205 = vmatpush1.bf16.msra.mxu0 0
    %206 = vmatprep.subr.bf16.mxu0 0
    %207 = vmatpush1.bf16.msra.mxu0 0
    %208 = vmatprep.subr.bf16.mxu0 0
    %209 = vmatpush1.bf16.msra.mxu0 0
    %210 = vmatprep.mubr.bf16.mxu0 0
    %211 = vmatmul.mubr.bf16.gmra.mrb[0].mxu0 %v69
    %v212 = vpop.f32.mrb[0].mxu0
    %v213 = vadd.f32 %v91, %v212
    %v214 = vpop.f32.mrb[0].mxu0
    %v215 = vadd.f32 %v95, %v214
    %v216 = vpop.f32.mrb[0].mxu0
    %v217 = vpop.f32.mrb[0].mxu0
    %218 = vdwg.mxu0
    %v219 = vmax.f32 %v213, 0.0
    %v220 = vmax.f32 %v215, 0.0
    %v221 = vpack.c.bf16 %v219, %v219
    %v222 = vpack.c.bf16 %v220, %v220
    %v223 = vld [vmem:[#allocation8] sm:$0xff]
    %v224 = vld [vmem:[#allocation8 + $0x8] sm:$0xff]
    %v225 = vld [vmem:[#allocation8 + $0x10] sm:$0xff]
    %v226 = vld [vmem:[#allocation8 + $0x18] sm:$0xff]
    %v227 = vld [vmem:[#allocation8 + $0x20] sm:$0xff]
    %v228 = vld [vmem:[#allocation8 + $0x28] sm:$0xff]
    %v229 = vld [vmem:[#allocation8 + $0x30] sm:$0xff]
    %v230 = vld [vmem:[#allocation8 + $0x38] sm:$0xff]
    %v231 = vld [vmem:[#allocation8 + $0x40] sm:$0xff]
    %v232 = vld [vmem:[#allocation8 + $0x48] sm:$0xff]
    %v233 = vld [vmem:[#allocation8 + $0x50] sm:$0xff]
    %v234 = vld [vmem:[#allocation8 + $0x58] sm:$0xff]
    %v235 = vld [vmem:[#allocation8 + $0x60] sm:$0xff]
    %v236 = vld [vmem:[#allocation8 + $0x68] sm:$0xff]
    %v237 = vld [vmem:[#allocation8 + $0x70] sm:$0xff]
    %v238 = vld [vmem:[#allocation8 + $0x78] sm:$0xff]
    %v239 = vld [vmem:[#allocation8 + $0x80] sm:$0xff]
    %v240 = vld [vmem:[#allocation8 + $0x88] sm:$0xff]
    %v241 = vld [vmem:[#allocation8 + $0x90] sm:$0xff]
    %v242 = vld [vmem:[#allocation8 + $0x98] sm:$0xff]
    %v243 = vld [vmem:[#allocation8 + $0xa0] sm:$0xff]
    %v244 = vld [vmem:[#allocation8 + $0xa8] sm:$0xff]
    %v245 = vld [vmem:[#allocation8 + $0xb0] sm:$0xff]
    %v246 = vld [vmem:[#allocation8 + $0xb8] sm:$0xff]
    %v247 = vld [vmem:[#allocation8 + $0xc0] sm:$0xff]
    %v248 = vld [vmem:[#allocation8 + $0xc8] sm:$0xff]
    %v249 = vld [vmem:[#allocation8 + $0xd0] sm:$0xff]
    %v250 = vld [vmem:[#allocation8 + $0xd8] sm:$0xff]
    %v251 = vld [vmem:[#allocation8 + $0xe0] sm:$0xff]
    %v252 = vld [vmem:[#allocation8 + $0xe8] sm:$0xff]
    %v253 = vld [vmem:[#allocation8 + $0xf0] sm:$0xff]
    %v254 = vld [vmem:[#allocation8 + $0xf8] sm:$0xff]
    %v255 = vld [vmem:[%s4] sm:$0x3]
    %v257 = vlaneseq
    %v258 = vshrl.u32 %v257, 7
    %v259 = vsub.s32 0, %v258
    %v260 = vrot.slane %v255, %v259
    %v261 = vlaneseq
    %v262 = vshrl.u32 %v261, 7
    %v263 = vsub.s32 1, %v262
    %v264 = vrot.slane %v255, %v263
    %v299 = vunpack.c.l.b16 %v223
    %v300 = vunpack.c.h.b16 %v223
    %v301 = vunpack.c.l.b16 %v224
    %v302 = vunpack.c.h.b16 %v224
    %v303 = vunpack.c.l.b16 %v225
    %v304 = vunpack.c.h.b16 %v225
    %v305 = vunpack.c.l.b16 %v226
    %v306 = vunpack.c.h.b16 %v226
    %v307 = vunpack.c.l.b16 %v227
    %v308 = vunpack.c.h.b16 %v227
    %v309 = vunpack.c.l.b16 %v228
    %v310 = vunpack.c.h.b16 %v228
    %v311 = vunpack.c.l.b16 %v229
    %v312 = vunpack.c.h.b16 %v229
    %v313 = vunpack.c.l.b16 %v230
    %v314 = vunpack.c.h.b16 %v230
    %v315 = vunpack.c.l.b16 %v231
    %v316 = vunpack.c.h.b16 %v231
    %v317 = vunpack.c.l.b16 %v232
    %v318 = vunpack.c.h.b16 %v232
    %v319 = vunpack.c.l.b16 %v233
    %v320 = vunpack.c.h.b16 %v233
    %v321 = vunpack.c.l.b16 %v234
    %v322 = vunpack.c.h.b16 %v234
    %v323 = vunpack.c.l.b16 %v235
    %v324 = vunpack.c.h.b16 %v235
    %v325 = vunpack.c.l.b16 %v236
    %v326 = vunpack.c.h.b16 %v236
    %v327 = vunpack.c.l.b16 %v237
    %v328 = vunpack.c.h.b16 %v237
    %v329 = vunpack.c.l.b16 %v238
    %v330 = vunpack.c.h.b16 %v238
    %v331 = vunpack.c.l.b16 %v239
    %v332 = vunpack.c.h.b16 %v239
    %v333 = vunpack.c.l.b16 %v240
    %v334 = vunpack.c.h.b16 %v240
    %v335 = vunpack.c.l.b16 %v241
    %v336 = vunpack.c.h.b16 %v241
    %v337 = vunpack.c.l.b16 %v242
    %v338 = vunpack.c.h.b16 %v242
    %v339 = vunpack.c.l.b16 %v243
    %v340 = vunpack.c.h.b16 %v243
    %v341 = vunpack.c.l.b16 %v244
    %v342 = vunpack.c.h.b16 %v244
    %v343 = vunpack.c.l.b16 %v245
    %v344 = vunpack.c.h.b16 %v245
    %v345 = vunpack.c.l.b16 %v246
    %v346 = vunpack.c.h.b16 %v246
    %v347 = vunpack.c.l.b16 %v247
    %v348 = vunpack.c.h.b16 %v247
    %v349 = vunpack.c.l.b16 %v248
    %v350 = vunpack.c.h.b16 %v248
    %v351 = vunpack.c.l.b16 %v249
    %v352 = vunpack.c.h.b16 %v249
    %v353 = vunpack.c.l.b16 %v250
    %v354 = vunpack.c.h.b16 %v250
    %v355 = vunpack.c.l.b16 %v251
    %v356 = vunpack.c.h.b16 %v251
    %v357 = vunpack.c.l.b16 %v252
    %v358 = vunpack.c.h.b16 %v252
    %v359 = vunpack.c.l.b16 %v253
    %v360 = vunpack.c.h.b16 %v253
    %v361 = vunpack.c.l.b16 %v254
    %v362 = vunpack.c.h.b16 %v254
    %v363 = vpack.c.b16 %v301, %v299
    %v364 = vpack.c.b16 %v302, %v300
    %v365 = vpack.c.b16 %v305, %v303
    %v366 = vpack.c.b16 %v306, %v304
    %v367 = vpack.c.b16 %v309, %v307
    %v368 = vpack.c.b16 %v310, %v308
    %v369 = vpack.c.b16 %v313, %v311
    %v370 = vpack.c.b16 %v314, %v312
    %v371 = vpack.c.b16 %v317, %v315
    %v372 = vpack.c.b16 %v318, %v316
    %v373 = vpack.c.b16 %v321, %v319
    %v374 = vpack.c.b16 %v322, %v320
    %v375 = vpack.c.b16 %v325, %v323
    %v376 = vpack.c.b16 %v326, %v324
    %v377 = vpack.c.b16 %v329, %v327
    %v378 = vpack.c.b16 %v330, %v328
    %v379 = vpack.c.b16 %v333, %v331
    %v380 = vpack.c.b16 %v334, %v332
    %v381 = vpack.c.b16 %v337, %v335
    %v382 = vpack.c.b16 %v338, %v336
    %v383 = vpack.c.b16 %v341, %v339
    %v384 = vpack.c.b16 %v342, %v340
    %v385 = vpack.c.b16 %v345, %v343
    %v386 = vpack.c.b16 %v346, %v344
    %v387 = vpack.c.b16 %v349, %v347
    %v388 = vpack.c.b16 %v350, %v348
    %v389 = vpack.c.b16 %v353, %v351
    %v390 = vpack.c.b16 %v354, %v352
    %v391 = vpack.c.b16 %v357, %v355
    %v392 = vpack.c.b16 %v358, %v356
    %v393 = vpack.c.b16 %v361, %v359
    %v394 = vpack.c.b16 %v362, %v360
    %427 = vmatprep.subr.bf16.mxu0 %v364
    %428 = vmatpush1.bf16.msra.mxu0 %v363
    %429 = vmatprep.subr.bf16.mxu0 %v366
    %430 = vmatpush1.bf16.msra.mxu0 %v365
    %431 = vmatprep.subr.bf16.mxu0 %v368
    %432 = vmatpush1.bf16.msra.mxu0 %v367
    %433 = vmatprep.subr.bf16.mxu0 %v370
    %434 = vmatpush1.bf16.msra.mxu0 %v369
    %435 = vmatprep.subr.bf16.mxu0 %v372
    %436 = vmatpush1.bf16.msra.mxu0 %v371
    %437 = vmatprep.subr.bf16.mxu0 %v374
    %438 = vmatpush1.bf16.msra.mxu0 %v373
    %439 = vmatprep.subr.bf16.mxu0 %v376
    %440 = vmatpush1.bf16.msra.mxu0 %v375
    %441 = vmatprep.subr.bf16.mxu0 %v378
    %442 = vmatpush1.bf16.msra.mxu0 %v377
    %443 = vmatprep.subr.bf16.mxu0 %v380
    %444 = vmatpush1.bf16.msra.mxu0 %v379
    %445 = vmatprep.subr.bf16.mxu0 %v382
    %446 = vmatpush1.bf16.msra.mxu0 %v381
    %447 = vmatprep.subr.bf16.mxu0 %v384
    %448 = vmatpush1.bf16.msra.mxu0 %v383
    %449 = vmatprep.subr.bf16.mxu0 %v386
    %450 = vmatpush1.bf16.msra.mxu0 %v385
    %451 = vmatprep.subr.bf16.mxu0 %v388
    %452 = vmatpush1.bf16.msra.mxu0 %v387
    %453 = vmatprep.subr.bf16.mxu0 %v390
    %454 = vmatpush1.bf16.msra.mxu0 %v389
    %455 = vmatprep.subr.bf16.mxu0 %v392
    %456 = vmatpush1.bf16.msra.mxu0 %v391
    %457 = vmatprep.subr.bf16.mxu0 %v394
    %458 = vmatpush1.bf16.msra.mxu0 %v393
    %459 = vmatprep.mubr.bf16.mxu0 %v222
    %460 = vmatmul.mubr.bf16.gmra.mrb[0].mxu0 %v221
    %v461 = vpop.f32.mrb[0].mxu0
    %v462 = vadd.f32 %v260, %v461
    %v463 = vpop.f32.mrb[0].mxu0
    %v464 = vadd.f32 %v264, %v463
    %v465 = vpop.f32.mrb[0].mxu0
    %v466 = vpop.f32.mrb[0].mxu0
    %467 = vdwg.mxu0
    %v468 = vmax.f32 %v462, 0.0
    %v469 = vmax.f32 %v464, 0.0
    %v470 = vld [vmem:[%s5] sm:$0x3]
    %v471 = vunpack.c.l.bf16 %v470
    %v473 = vlaneseq
    %v474 = vshrl.u32 %v473, 7
    %v475 = vsub.s32 0, %v474
    %v476 = vrot.slane %v471, %v475
    %v477 = vlaneseq
    %v478 = vshrl.u32 %v477, 7
    %v479 = vsub.s32 2, %v478
    %v480 = vrot.slane %v471, %v479
    %v483 = vlaneseq
    %v484 = vshrl.u32 %v483, 7
    %v485 = vsub.s32 0, %v484
    %v486 = vrot.slane %v476, %v485
    %v487 = vlaneseq
    %v488 = vshrl.u32 %v487, 7
    %v489 = vsub.s32 0, %v488
    %v490 = vrot.slane %v480, %v489
    %v491 = vmul.f32 %v468, %v486
    %v492 = vmul.f32 %v469, %v490
    %v493 = vadd.f32 %v491, %v492
    %494 = vadd.xlane.f32.xlu0 %v493
    %v495 = vpop.xlane.xlu0 %494
    %v496 = vld [vmem:[#allocation2] sm:$0x1]
    %v498 = vlaneseq
    %v499 = vshrl.u32 %v498, 7
    %v500 = vsub.s32 0, %v499
    %v501 = vrot.slane %v496, %v500
    %v503 = vadd.f32 %v495, %v501
    %505 = vset.pattern.permute.xlu0 0
    %506 = vperm.xlu0 %505, %v503
    %v507 = vpop.permute.xlu0 %506
    %509 = vst [vmem:[#allocation9] sm:$0xff] %v507
    // Predicated region
    $region42: #{tpu_custom_call.1} parent=1 // pred_check
      _
    $region43: #{tpu_custom_call.1} parent=1 // pred_check_branch
      %511 = sbr.rel (0) target = $region45
    $region44: #{tpu_custom_call.1} parent=1 // pred_region
      %s513 = ssub.s32 128, 128
      %514 = vsyncadd [#allocation5], %s513
      %s516 = sshll.u32 [#allocation9], 4
      %s517 = int_to_ptr.vmem [resolvable:$true] %s516
      %519 = dma.vmem_to_hbm [thread:$0]  %s517, 128, %s7, [#allocation5]
    $region45: #{tpu_custom_call.1} parent=1 // pred_fallthru
      _
    // Predicated region
    $region46: #{tpu_custom_call.1} parent=1 // pred_check
      _
    $region47: #{tpu_custom_call.1} parent=1 // pred_check_branch
      %521 = sbr.rel (0) target = $region49
    $region48: #{tpu_custom_call.1} parent=1 // pred_region
      %522 = dma.done [#allocation5], 128
    $region49: #{tpu_custom_call.1} parent=1 // pred_fallthru
      _
    %523 = vsyncpa [#allocation4], 1
    %524 = vsyncpa [#allocation7], 1
    %525 = vsyncpa [#allocation5], 1

</llo_original>
